<compile_context>
chip_gen: v7x
topology: tpu7x:2x2x1
jax: 0.10.0
libtpu: 0.0.40
codegen_flags: <defaults>
</compile_context>

<pallas_src>
import jax
import jax.numpy as jnp
from jax.experimental import pallas as pl
from jax.experimental.pallas import tpu as pltpu

EPS = 1e-5          # torch BatchNorm1d default
LANE = 128
TILE_B_MAX = 2048   # largest batch tile (lane dim of the feature-major blocks)


def _cdiv(a, b):
    return (a + b - 1) // b


def _round_up(n, m):
    return _cdiv(n, m) * m


# --------------------------------------------------------------------------
# Kernel: feature-major fused  [one-hot gather] -> (Linear+ReLU)* -> Linear
#         -> sigmoid (+ optional y_range affine)
# --------------------------------------------------------------------------
def make_fused_kernel(n_hidden, cat_offsets, c_total, y_range):
    """Ref layout (all feature-major, batch on lanes):
         x_cat  (n_cat, tb) int32 , x_cont (n_num, tb) f32,
         w_emb  (H1, c_total) bf16, w_cont (H1, n_num) bf16, b1 (H1, 1) f32,
         [w_i (H_i, H_{i-1}) bf16, b_i (H_i, 1) f32] * (n_hidden - 1),
         w_out (out, H_last) bf16, b_out (out, 1) f32,
         out   (out, tb) f32."""
    y_lo, y_hi = float(y_range[0]), float(y_range[1])
    identity_range = (y_lo == 0.0 and y_hi == 1.0)
    offsets = tuple(int(o) for o in cat_offsets)

    def kernel(x_cat_ref, x_cont_ref, *refs):
        out_ref = refs[-1]
        wref = refs[:-1]
        tb = x_cat_ref.shape[1]

        # ---- in-kernel embedding "gather": multi-hot @ (tables folded into W1)
        # Categorical id ranges are disjoint after offsetting, so per-feature
        # one-hots OR into a single (c_total, tb) multi-hot built on the VPU.
        ids = x_cat_ref[...]                                         # (n_cat, tb)
        row_iota = jax.lax.broadcasted_iota(jnp.int32, (c_total, tb), 0)
        hot = None
        for f, off in enumerate(offsets):
            m = row_iota == (ids[f:f + 1, :] + off)                  # (c_total, tb)
            hot = m if hot is None else jnp.logical_or(hot, m)
        multi_hot = jnp.where(hot, 1.0, 0.0).astype(jnp.bfloat16)

        # ---- layer 1: embedding contribution (MXU one-hot matmul)
        #      + cont-BN-folded numerical contribution + bias, ReLU
        xn = x_cont_ref[...].astype(jnp.bfloat16)                    # (n_num, tb)
        h = jnp.dot(wref[0][...], multi_hot, preferred_element_type=jnp.float32)
        h = h + jnp.dot(wref[1][...], xn, preferred_element_type=jnp.float32)
        h = jnp.maximum(h + wref[2][...], 0.0)                       # (H1, tb) f32

        # ---- remaining hidden layers (post-ReLU BN folded into next W/b)
        idx = 3
        for _ in range(n_hidden - 1):
            h = jnp.dot(wref[idx][...], h.astype(jnp.bfloat16),
                        preferred_element_type=jnp.float32) + wref[idx + 1][...]
            h = jnp.maximum(h, 0.0)
            idx += 2

        # ---- output layer + sigmoid (+ optional y_range affine)
        y = jnp.dot(wref[idx][...], h.astype(jnp.bfloat16),
                    preferred_element_type=jnp.float32) + wref[idx + 1][...]
        y = jax.nn.sigmoid(y)
        if not identity_range:
            y = y * (y_hi - y_lo) + y_lo
        out_ref[...] = y                                             # (out, tb)

    return kernel


# --------------------------------------------------------------------------
# Parameters (PyTorch-init-shaped) and one-time inference prep (fold + cast)
# --------------------------------------------------------------------------
def init_params(key, embedding_sizes, num_numerical, hidden_layers, out_size):
    n_keys = 4 + 8 * (len(hidden_layers) + len(embedding_sizes) + 2)
    keys = iter(jax.random.split(key, n_keys))
    p = {}

    # Embedding tables, kaiming_uniform_ (fan_in = emb_dim).
    p["emb_tables"] = []
    for card, dim in embedding_sizes:
        bound = (6.0 / dim) ** 0.5
        p["emb_tables"].append(
            jax.random.uniform(next(keys), (card, dim), jnp.float32, -bound, bound))

    num_emb = sum(d for _, d in embedding_sizes)
    sizes = [num_emb + num_numerical] + list(hidden_layers)

    # BatchNorm1d over the numerical features (running stats, eval mode).
    p["cont_bn"] = dict(
        gamma=1.0 + 0.1 * jax.random.normal(next(keys), (1, num_numerical)),
        beta=0.1 * jax.random.normal(next(keys), (1, num_numerical)),
        mean=0.1 * jax.random.normal(next(keys), (1, num_numerical)),
        var=jax.random.uniform(next(keys), (1, num_numerical),
                               minval=0.5, maxval=1.5),
    )

    # Hidden fc layers (weights stored as (in, out)) + their BatchNorms.
    p["layers"] = []
    for i in range(len(hidden_layers)):
        fan_in, fan_out = sizes[i], sizes[i + 1]
        std = (2.0 / fan_in) ** 0.5  # kaiming_normal_
        w = std * jax.random.normal(next(keys), (fan_in, fan_out), jnp.float32)
        b_bound = 1.0 / (fan_in ** 0.5)
        b = jax.random.uniform(next(keys), (1, fan_out), jnp.float32,
                               -b_bound, b_bound)
        bn = dict(
            gamma=1.0 + 0.1 * jax.random.normal(next(keys), (1, fan_out)),
            beta=0.1 * jax.random.normal(next(keys), (1, fan_out)),
            mean=0.1 * jax.random.normal(next(keys), (1, fan_out)),
            var=jax.random.uniform(next(keys), (1, fan_out),
                                   minval=0.5, maxval=1.5),
        )
        p["layers"].append(dict(w=w, b=b, bn=bn))

    # Output layer.
    fan_in = sizes[-1]
    std = (2.0 / fan_in) ** 0.5
    p["w_out"] = std * jax.random.normal(next(keys), (fan_in, out_size), jnp.float32)
    b_bound = 1.0 / (fan_in ** 0.5)
    p["b_out"] = jax.random.uniform(next(keys), (1, out_size), jnp.float32,
                                    -b_bound, b_bound)
    p["num_emb"] = num_emb
    return p


def prepare_inference_params(params, y_range=(0.0, 1.0), eps=EPS):
    """Fold eval-mode BNs and the embedding tables into the Linears, transpose
    to feature-major, cast weights to bf16.  Done ONCE host-side."""
    E = params["num_emb"]
    layers = params["layers"]
    cbn = params["cont_bn"]

    # cont-BN:  BN(x) = x*s + t  -> fold into the x_cont rows of W1 / b1
    s_c = cbn["gamma"] * jax.lax.rsqrt(cbn["var"] + eps)              # (1, C)
    t_c = cbn["beta"] - cbn["mean"] * s_c                             # (1, C)
    w1, b1 = layers[0]["w"], layers[0]["b"]                           # (K,H1),(1,H1)
    w1_cont = w1[E:, :] * s_c.T                                       # (C, H1)
    b1_f = b1 + t_c @ w1[E:, :]                                       # (1, H1)

    # Embedding tables fold into W1's embedding rows:  onehot @ (T_i @ W1_rows_i)
    w1_emb_blocks, offsets = [], []
    row, c_total = 0, 0
    for tbl in params["emb_tables"]:
        card, dim = tbl.shape
        w1_emb_blocks.append(tbl @ w1[row:row + dim, :])              # (card, H1)
        offsets.append(c_total)
        row += dim
        c_total += card
    w1_emb = jnp.concatenate(w1_emb_blocks, axis=0)                   # (c_total, H1)

    # post-ReLU BN of layer i folds into layer i+1's W/b; last one into output.
    prev_bn = layers[0]["bn"]
    mid = []
    for layer in layers[1:]:
        s = prev_bn["gamma"] * jax.lax.rsqrt(prev_bn["var"] + eps)
        t = prev_bn["beta"] - prev_bn["mean"] * s
        mid.append((layer["w"] * s.T, layer["b"] + t @ layer["w"]))
        prev_bn = layer["bn"]
    s = prev_bn["gamma"] * jax.lax.rsqrt(prev_bn["var"] + eps)
    t = prev_bn["beta"] - prev_bn["mean"] * s
    w_out_f = params["w_out"] * s.T
    b_out_f = params["b_out"] + t @ params["w_out"]

    # Kernel operands: transposed (out_features, in_features), bf16 weights,
    # f32 (out,1) biases.
    operands = [
        jnp.asarray(w1_emb.T, jnp.bfloat16),      # (H1, c_total)
        jnp.asarray(w1_cont.T, jnp.bfloat16),     # (H1, n_num)
        jnp.asarray(b1_f.T, jnp.float32),         # (H1, 1)
    ]
    for w, b in mid:
        operands.append(jnp.asarray(w.T, jnp.bfloat16))
        operands.append(jnp.asarray(b.T, jnp.float32))
    operands.append(jnp.asarray(w_out_f.T, jnp.bfloat16))
    operands.append(jnp.asarray(b_out_f.T, jnp.float32))

    return dict(
        operands=[jax.device_put(o) for o in operands],
        cat_offsets=tuple(offsets),
        c_total=int(c_total),
        n_hidden=len(layers),
        out_size=int(params["w_out"].shape[1]),
        y_range=(float(y_range[0]), float(y_range[1])),
    )


# --------------------------------------------------------------------------
# Forward
# --------------------------------------------------------------------------
def _choose_batch_tiling(B):
    """Lane-aligned batch tiles; keep padding small and grid >= 2 steps when
    possible so v7x megacore can shard the parallel axis over both TCs."""
    b_lane = _round_up(max(B, 1), LANE)
    n_steps = _cdiv(b_lane, TILE_B_MAX)
    if b_lane >= 2 * LANE:
        n_steps = max(n_steps, 2)
    tile_b = _round_up(_cdiv(b_lane, n_steps), LANE)
    b_pad = _round_up(b_lane, tile_b)
    return tile_b, b_pad


def model_forward(inf, x_cat, x_cont):
    B, n_cat = x_cat.shape
    n_num = x_cont.shape[1]
    out_size = inf["out_size"]
    operands = inf["operands"]

    tile_b, b_pad = _choose_batch_tiling(B)
    grid = (b_pad // tile_b,)

    # Feature-major raw inputs (no K padding): ~32 B of HBM traffic per row.
    xcat_t = jnp.pad(jnp.transpose(x_cat.astype(jnp.int32)),
                     ((0, 0), (0, b_pad - B)))
    xcont_t = jnp.pad(jnp.transpose(x_cont.astype(jnp.float32)),
                      ((0, 0), (0, b_pad - B)))

    kernel = make_fused_kernel(inf["n_hidden"], inf["cat_offsets"],
                               inf["c_total"], inf["y_range"])

    in_specs = [pl.BlockSpec((n_cat, tile_b), lambda i: (0, i)),
                pl.BlockSpec((n_num, tile_b), lambda i: (0, i))]
    # Weights/biases: full blocks with constant index_map -> resident in VMEM.
    in_specs += [pl.BlockSpec(op.shape, lambda i: (0, 0)) for op in operands]
    out_spec = pl.BlockSpec((out_size, tile_b), lambda i: (0, i))

    out = pl.pallas_call(
        kernel,
        grid=grid,
        out_shape=jax.ShapeDtypeStruct((out_size, b_pad), jnp.float32),
        in_specs=in_specs,
        out_specs=out_spec,
        compiler_params=pltpu.CompilerParams(
            dimension_semantics=("parallel",)),
    )(xcat_t, xcont_t, *operands)

    y = jnp.transpose(out[:, :B])        # (B, out_size)
    return jnp.squeeze(y)                # torch-style .squeeze()


# --------------------------------------------------------------------------
# Pure-JAX reference (unfolded BN math) for correctness checking
# --------------------------------------------------------------------------
def reference_forward(params, x_cat, x_cont, y_range=(0.0, 1.0), eps=EPS):
    emb = [jnp.take(t, x_cat[:, i], axis=0)
           for i, t in enumerate(params["emb_tables"])]
    x_emb = jnp.concatenate(emb, axis=1)
    cbn = params["cont_bn"]
    x2 = ((x_cont - cbn["mean"]) * jax.lax.rsqrt(cbn["var"] + eps)
          * cbn["gamma"] + cbn["beta"])
    h = jnp.concatenate([x_emb, x2], axis=1)
    for layer in params["layers"]:
        h = jnp.maximum(h @ layer["w"] + layer["b"], 0.0)
        bn = layer["bn"]
        h = ((h - bn["mean"]) * jax.lax.rsqrt(bn["var"] + eps)
             * bn["gamma"] + bn["beta"])
    y = h @ params["w_out"] + params["b_out"]
    y = jax.nn.sigmoid(y)
    y = y * (y_range[1] - y_range[0]) + y_range[0]
    return jnp.squeeze(y)


if __name__ == "__main__":
    embedding_sizes = [(10, 4), (12, 6), (7, 3)]   # (cardinality, emb_dim)
    num_numerical = 5
    hidden_layers = [32, 16]
    out_size = 1

    key = jax.random.PRNGKey(0)
    k_par, k_data = jax.random.split(key)

    params = init_params(k_par, embedding_sizes, num_numerical,
                         hidden_layers, out_size)
    inf = prepare_inference_params(params, y_range=(0.0, 1.0))
    cards = jnp.array([c for c, _ in embedding_sizes], dtype=jnp.int32)

    # batch=8 exercises the single-tile path, batch=300 the multi-step
    # (2-tile, ragged / padded batch) path.
    for batch in (8, 300):
        kc, kn = jax.random.split(jax.random.fold_in(k_data, batch))
        x_cat = (jax.random.randint(kc, (batch, len(embedding_sizes)), 0, 10 ** 6)
                 % cards).astype(jnp.int32)
        x_cont = jax.random.normal(kn, (batch, num_numerical), jnp.float32)

        y = jax.block_until_ready(model_forward(inf, x_cat, x_cont))
        y_ref = jax.block_until_ready(reference_forward(params, x_cat, x_cont))

        assert y.shape == (batch,)
        assert bool(jnp.all(jnp.isfinite(y)))
        assert bool(jnp.all((y >= 0.0) & (y <= 1.0)))
        # bf16 weights/activations (f32 accumulation) -> relaxed tolerance.
        assert bool(jnp.allclose(y, y_ref, atol=2e-2, rtol=2e-2)), \
            float(jnp.max(jnp.abs(y - y_ref)))

    print("KERNEL_OK")
</pallas_src>

<mosaic_0001>
module attributes {stable_mosaic.version = 11 : i64} {
  func.func @kernel(%arg0: i32, %arg1: memref<3x128xi32, #tpu.memory_space<vmem>>, %arg2: memref<5x128xf32, #tpu.memory_space<vmem>>, %arg3: memref<32x29xbf16, #tpu.memory_space<vmem>>, %arg4: memref<32x5xbf16, #tpu.memory_space<vmem>>, %arg5: memref<32x1xf32, #tpu.memory_space<vmem>>, %arg6: memref<16x32xbf16, #tpu.memory_space<vmem>>, %arg7: memref<16x1xf32, #tpu.memory_space<vmem>>, %arg8: memref<1x16xbf16, #tpu.memory_space<vmem>>, %arg9: memref<1x1xf32, #tpu.memory_space<vmem>>, %arg10: memref<1x128xf32, #tpu.memory_space<vmem>>) attributes {dimension_semantics = [#tpu.dimension_semantics<parallel>], iteration_bounds = array<i64: 1>, scalar_prefetch = 0 : i64, scratch_operands = 0 : i64, tpu.core_type = #tpu.core_type<tc>, window_params = [{transform_indices = @transform_0, window_bounds = array<i64: 3, 128>}, {transform_indices = @transform_1, window_bounds = array<i64: 5, 128>}, {pipeline_mode = #tpu.pipeline_mode<synchronous>, transform_indices = @transform_2, window_bounds = array<i64: 32, 29>}, {pipeline_mode = #tpu.pipeline_mode<synchronous>, transform_indices = @transform_3, window_bounds = array<i64: 32, 5>}, {pipeline_mode = #tpu.pipeline_mode<synchronous>, transform_indices = @transform_4, window_bounds = array<i64: 32, 1>}, {pipeline_mode = #tpu.pipeline_mode<synchronous>, transform_indices = @transform_5, window_bounds = array<i64: 16, 32>}, {pipeline_mode = #tpu.pipeline_mode<synchronous>, transform_indices = @transform_6, window_bounds = array<i64: 16, 1>}, {pipeline_mode = #tpu.pipeline_mode<synchronous>, transform_indices = @transform_7, window_bounds = array<i64: 1, 16>}, {pipeline_mode = #tpu.pipeline_mode<synchronous>, transform_indices = @transform_8, window_bounds = array<i64: 1, 1>}, {transform_indices = @transform_9, window_bounds = array<i64: 1, 128>}]} {
    %c0 = arith.constant 0 : index
    %c0_0 = arith.constant 0 : index
    %0 = vector.load %arg1[%c0, %c0_0] : memref<3x128xi32, #tpu.memory_space<vmem>>, vector<3x128xi32>
    %1 = tpu.iota {dimensions = array<i32: 0>} : vector<29x128xi32>
    %2 = vector.extract_strided_slice %0 {offsets = [0, 0], sizes = [1, 128], strides = [1, 1]} : vector<3x128xi32> to vector<1x128xi32>
    %c0_i32 = arith.constant 0 : i32
    %3 = vector.broadcast %c0_i32 : i32 to vector<1x128xi32>
    %4 = arith.addi %2, %3 : vector<1x128xi32>
    %5 = vector.broadcast %4 : vector<1x128xi32> to vector<29x128xi32>
    %6 = arith.cmpi eq, %1, %5 : vector<29x128xi32>
    %7 = vector.extract_strided_slice %0 {offsets = [1, 0], sizes = [1, 128], strides = [1, 1]} : vector<3x128xi32> to vector<1x128xi32>
    %c10_i32 = arith.constant 10 : i32
    %8 = vector.broadcast %c10_i32 : i32 to vector<1x128xi32>
    %9 = arith.addi %7, %8 : vector<1x128xi32>
    %10 = vector.broadcast %9 : vector<1x128xi32> to vector<29x128xi32>
    %11 = arith.cmpi eq, %1, %10 : vector<29x128xi32>
    %12 = arith.ori %6, %11 : vector<29x128xi1>
    %13 = vector.extract_strided_slice %0 {offsets = [2, 0], sizes = [1, 128], strides = [1, 1]} : vector<3x128xi32> to vector<1x128xi32>
    %c22_i32 = arith.constant 22 : i32
    %14 = vector.broadcast %c22_i32 : i32 to vector<1x128xi32>
    %15 = arith.addi %13, %14 : vector<1x128xi32>
    %16 = vector.broadcast %15 : vector<1x128xi32> to vector<29x128xi32>
    %17 = arith.cmpi eq, %1, %16 : vector<29x128xi32>
    %18 = arith.ori %12, %17 : vector<29x128xi1>
    %cst = arith.constant 1.000000e+00 : f32
    %cst_1 = arith.constant 0.000000e+00 : f32
    %19 = vector.broadcast %cst : f32 to vector<29x128xf32>
    %20 = vector.broadcast %cst_1 : f32 to vector<29x128xf32>
    %21 = arith.select %18, %19, %20 : vector<29x128xi1>, vector<29x128xf32>
    %22 = arith.truncf %21 : vector<29x128xf32> to vector<29x128xbf16>
    %c0_2 = arith.constant 0 : index
    %c0_3 = arith.constant 0 : index
    %23 = vector.load %arg2[%c0_2, %c0_3] : memref<5x128xf32, #tpu.memory_space<vmem>>, vector<5x128xf32>
    %24 = arith.truncf %23 : vector<5x128xf32> to vector<5x128xbf16>
    %c0_4 = arith.constant 0 : index
    %c0_5 = arith.constant 0 : index
    %25 = vector.load %arg3[%c0_4, %c0_5] : memref<32x29xbf16, #tpu.memory_space<vmem>>, vector<32x29xbf16>
    %cst_6 = arith.constant dense<0.000000e+00> : vector<32x128xf32>
    %26 = tpu.matmul %25, %22, %cst_6 {dimension_numbers = #tpu.dot_dimension_numbers<[1], [0], [0], [1], [0, 0, 1, 1], [], []>} : vector<32x29xbf16>, vector<29x128xbf16>, vector<32x128xf32> -> vector<32x128xf32>
    %c0_7 = arith.constant 0 : index
    %c0_8 = arith.constant 0 : index
    %27 = vector.load %arg4[%c0_7, %c0_8] : memref<32x5xbf16, #tpu.memory_space<vmem>>, vector<32x5xbf16>
    %cst_9 = arith.constant dense<0.000000e+00> : vector<32x128xf32>
    %28 = tpu.matmul %27, %24, %cst_9 {dimension_numbers = #tpu.dot_dimension_numbers<[1], [0], [0], [1], [0, 0, 1, 1], [], []>} : vector<32x5xbf16>, vector<5x128xbf16>, vector<32x128xf32> -> vector<32x128xf32>
    %29 = arith.addf %26, %28 : vector<32x128xf32>
    %c0_10 = arith.constant 0 : index
    %c0_11 = arith.constant 0 : index
    %30 = vector.load %arg5[%c0_10, %c0_11] : memref<32x1xf32, #tpu.memory_space<vmem>>, vector<32x1xf32>
    %31 = vector.broadcast %30 : vector<32x1xf32> to vector<32x128xf32>
    %32 = arith.addf %29, %31 : vector<32x128xf32>
    %cst_12 = arith.constant 0.000000e+00 : f32
    %33 = vector.broadcast %cst_12 : f32 to vector<32x128xf32>
    %34 = arith.maximumf %32, %33 : vector<32x128xf32>
    %c0_13 = arith.constant 0 : index
    %c0_14 = arith.constant 0 : index
    %35 = vector.load %arg6[%c0_13, %c0_14] : memref<16x32xbf16, #tpu.memory_space<vmem>>, vector<16x32xbf16>
    %36 = arith.truncf %34 : vector<32x128xf32> to vector<32x128xbf16>
    %cst_15 = arith.constant dense<0.000000e+00> : vector<16x128xf32>
    %37 = tpu.matmul %35, %36, %cst_15 {dimension_numbers = #tpu.dot_dimension_numbers<[1], [0], [0], [1], [0, 0, 1, 1], [], []>} : vector<16x32xbf16>, vector<32x128xbf16>, vector<16x128xf32> -> vector<16x128xf32>
    %c0_16 = arith.constant 0 : index
    %c0_17 = arith.constant 0 : index
    %38 = vector.load %arg7[%c0_16, %c0_17] : memref<16x1xf32, #tpu.memory_space<vmem>>, vector<16x1xf32>
    %39 = vector.broadcast %38 : vector<16x1xf32> to vector<16x128xf32>
    %40 = arith.addf %37, %39 : vector<16x128xf32>
    %cst_18 = arith.constant 0.000000e+00 : f32
    %41 = vector.broadcast %cst_18 : f32 to vector<16x128xf32>
    %42 = arith.maximumf %40, %41 : vector<16x128xf32>
    %c0_19 = arith.constant 0 : index
    %c0_20 = arith.constant 0 : index
    %43 = vector.load %arg8[%c0_19, %c0_20] : memref<1x16xbf16, #tpu.memory_space<vmem>>, vector<1x16xbf16>
    %44 = arith.truncf %42 : vector<16x128xf32> to vector<16x128xbf16>
    %cst_21 = arith.constant dense<0.000000e+00> : vector<1x128xf32>
    %45 = tpu.matmul %43, %44, %cst_21 {dimension_numbers = #tpu.dot_dimension_numbers<[1], [0], [0], [1], [0, 0, 1, 1], [], []>} : vector<1x16xbf16>, vector<16x128xbf16>, vector<1x128xf32> -> vector<1x128xf32>
    %c0_22 = arith.constant 0 : index
    %c0_23 = arith.constant 0 : index
    %46 = vector.load %arg9[%c0_22, %c0_23] : memref<1x1xf32, #tpu.memory_space<vmem>>, vector<1x1xf32>
    %47 = vector.broadcast %46 : vector<1x1xf32> to vector<1x128xf32>
    %48 = arith.addf %45, %47 : vector<1x128xf32>
    %49 = arith.negf %48 : vector<1x128xf32>
    %50 = math.exp %49 : vector<1x128xf32>
    %cst_24 = arith.constant 1.000000e+00 : f32
    %51 = vector.broadcast %cst_24 : f32 to vector<1x128xf32>
    %52 = arith.addf %51, %50 : vector<1x128xf32>
    %53 = arith.divf %51, %52 : vector<1x128xf32>
    %c0_25 = arith.constant 0 : index
    %c0_26 = arith.constant 0 : index
    %54 = vector.load %arg10[%c0_25, %c0_26] : memref<1x128xf32, #tpu.memory_space<vmem>>, vector<1x128xf32>
    tpu.vector_store %arg10[%c0_25, %c0_26], %53 {strides = array<i32>} : memref<1x128xf32, #tpu.memory_space<vmem>>, vector<1x128xf32>,
    return
  }
  func.func @transform_0(%arg0: i32) -> (i32, i32) {
    %c0_i32 = arith.constant 0 : i32
    %c0_i32_0 = arith.constant 0 : i32
    return %c0_i32, %arg0 : i32, i32
  }
  func.func @transform_1(%arg0: i32) -> (i32, i32) {
    %c0_i32 = arith.constant 0 : i32
    %c0_i32_0 = arith.constant 0 : i32
    return %c0_i32, %arg0 : i32, i32
  }
  func.func @transform_2(%arg0: i32) -> (i32, i32) {
    %c0_i32 = arith.constant 0 : i32
    %c0_i32_0 = arith.constant 0 : i32
    %c0_i32_1 = arith.constant 0 : i32
    return %c0_i32, %c0_i32_0 : i32, i32
  }
  func.func @transform_3(%arg0: i32) -> (i32, i32) {
    %c0_i32 = arith.constant 0 : i32
    %c0_i32_0 = arith.constant 0 : i32
    %c0_i32_1 = arith.constant 0 : i32
    return %c0_i32, %c0_i32_0 : i32, i32
  }
  func.func @transform_4(%arg0: i32) -> (i32, i32) {
    %c0_i32 = arith.constant 0 : i32
    %c0_i32_0 = arith.constant 0 : i32
    %c0_i32_1 = arith.constant 0 : i32
    return %c0_i32, %c0_i32_0 : i32, i32
  }
  func.func @transform_5(%arg0: i32) -> (i32, i32) {
    %c0_i32 = arith.constant 0 : i32
    %c0_i32_0 = arith.constant 0 : i32
    %c0_i32_1 = arith.constant 0 : i32
    return %c0_i32, %c0_i32_0 : i32, i32
  }
  func.func @transform_6(%arg0: i32) -> (i32, i32) {
    %c0_i32 = arith.constant 0 : i32
    %c0_i32_0 = arith.constant 0 : i32
    %c0_i32_1 = arith.constant 0 : i32
    return %c0_i32, %c0_i32_0 : i32, i32
  }
  func.func @transform_7(%arg0: i32) -> (i32, i32) {
    %c0_i32 = arith.constant 0 : i32
    %c0_i32_0 = arith.constant 0 : i32
    %c0_i32_1 = arith.constant 0 : i32
    return %c0_i32, %c0_i32_0 : i32, i32
  }
  func.func @transform_8(%arg0: i32) -> (i32, i32) {
    %c0_i32 = arith.constant 0 : i32
    %c0_i32_0 = arith.constant 0 : i32
    %c0_i32_1 = arith.constant 0 : i32
    return %c0_i32, %c0_i32_0 : i32, i32
  }
  func.func @transform_9(%arg0: i32) -> (i32, i32) {
    %c0_i32 = arith.constant 0 : i32
    %c0_i32_0 = arith.constant 0 : i32
    return %c0_i32, %arg0 : i32, i32
  }
}

</mosaic_0001>

<llo_original>
// kernel: tpu_custom_call.1
$region0: #{tpu_custom_call.1}
  #allocation0 [shape = 'u32[]', space=smem, size = 0x4, offset = 0x4, fixed_abs, tag = 'smem constant byte address 0x4 - core index']
  #allocation1 [shape = 'u32[144,128]{1,0:T(1,128)}', space=vmem, size = 0x12000, scoped, tag = 'internal scratch']
  #allocation2 [shape = 'f32[1,1]{1,0:T(1,128)S(1)}', space=vmem, size = 0x200, scoped, tag = 'scoped memory for tpu_custom_call.1']
  %s0 = inlined_call_operand.vmem [shape: s32[3,128], index: 0, kind: input, shape index: {}]
  %s1 = inlined_call_operand.vmem [shape: f32[5,128], index: 1, kind: input, shape index: {}]
  %s2 = inlined_call_operand.vmem [shape: bf16[32,29], index: 2, kind: input, shape index: {}]
  %s3 = inlined_call_operand.vmem [shape: bf16[32,5], index: 3, kind: input, shape index: {}]
  %s4 = inlined_call_operand.vmem [shape: f32[32,1], index: 4, kind: input, shape index: {}]
  %s5 = inlined_call_operand.vmem [shape: bf16[16,32], index: 5, kind: input, shape index: {}]
  %s6 = inlined_call_operand.vmem [shape: f32[16,1], index: 6, kind: input, shape index: {}]
  %s7 = inlined_call_operand.vmem [shape: bf16[1,16], index: 7, kind: input, shape index: {}]
  %s8 = inlined_call_operand.<no memory space> [shape: f32[1,1], index: 8, kind: input, shape index: {}]
  %s9 = inlined_call_operand.hbm [shape: f32[1,128], index: 9, kind: output, shape index: {}]
  %s10 = sld [smem:[#allocation0]]
  $region46: #{tpu_custom_call.1} parent=0
    _
  %s12 = ssub.s32 1, %s10
  %s13 = scalar_select 0, %s12, %s10
  %v14 = vstv %s8
  %15 = vst [vmem:[#allocation2] sm:$0x1] %v14
  $region1: #{tpu_custom_call.1} parent=0
    #allocation3 [shape = 'u8[512]{0}', space=vmem, size = 0x400, scoped, tag = 'output window, operand 0, single buffered']
    #allocation4 [shape = 's32[1]{0}', space=sflag, size = 0x4, scoped, tag = 'scoped memory for tpu_custom_call.1']
    %16 = vsyncpa [#allocation4], 0
    // Predicated region
    $region2: #{tpu_custom_call.1} parent=1 // pred_check
      _
    $region3: #{tpu_custom_call.1} parent=1 // pred_check_branch
      %18 = sbr.rel (0) target = $region5
    $region4: #{tpu_custom_call.1} parent=1 // pred_region
      _
    $region5: #{tpu_custom_call.1} parent=1 // pred_fallthru
      _
    // Predicated region
    $region6: #{tpu_custom_call.1} parent=1 // pred_check
      _
    $region7: #{tpu_custom_call.1} parent=1 // pred_check_branch
      %20 = sbr.rel (0) target = $region9
    $region8: #{tpu_custom_call.1} parent=1 // pred_region
      _
    $region9: #{tpu_custom_call.1} parent=1 // pred_fallthru
      _
    // Predicated region
    $region10: #{tpu_custom_call.1} parent=1 // pred_check
      _
    $region11: #{tpu_custom_call.1} parent=1 // pred_check_branch
      %22 = sbr.rel (0) target = $region13
    $region12: #{tpu_custom_call.1} parent=1 // pred_region
      _
    $region13: #{tpu_custom_call.1} parent=1 // pred_fallthru
      _
    // Predicated region
    $region14: #{tpu_custom_call.1} parent=1 // pred_check
      _
    $region15: #{tpu_custom_call.1} parent=1 // pred_check_branch
      %24 = sbr.rel (0) target = $region17
    $region16: #{tpu_custom_call.1} parent=1 // pred_region
      _
    $region17: #{tpu_custom_call.1} parent=1 // pred_fallthru
      _
    // Predicated region
    $region18: #{tpu_custom_call.1} parent=1 // pred_check
      _
    $region19: #{tpu_custom_call.1} parent=1 // pred_check_branch
      %26 = sbr.rel (0) target = $region21
    $region20: #{tpu_custom_call.1} parent=1 // pred_region
      _
    $region21: #{tpu_custom_call.1} parent=1 // pred_fallthru
      _
    // Predicated region
    $region22: #{tpu_custom_call.1} parent=1 // pred_check
      _
    $region23: #{tpu_custom_call.1} parent=1 // pred_check_branch
      %28 = sbr.rel (0) target = $region25
    $region24: #{tpu_custom_call.1} parent=1 // pred_region
      _
    $region25: #{tpu_custom_call.1} parent=1 // pred_fallthru
      _
    // Predicated region
    $region26: #{tpu_custom_call.1} parent=1 // pred_check
      _
    $region27: #{tpu_custom_call.1} parent=1 // pred_check_branch
      %30 = sbr.rel (0) target = $region29
    $region28: #{tpu_custom_call.1} parent=1 // pred_region
      _
    $region29: #{tpu_custom_call.1} parent=1 // pred_fallthru
      _
    // Predicated region
    $region30: #{tpu_custom_call.1} parent=1 // pred_check
      _
    $region31: #{tpu_custom_call.1} parent=1 // pred_check_branch
      %32 = sbr.rel (0) target = $region33
    $region32: #{tpu_custom_call.1} parent=1 // pred_region
      _
    $region33: #{tpu_custom_call.1} parent=1 // pred_fallthru
      _
    // Predicated region
    $region34: #{tpu_custom_call.1} parent=1 // pred_check
      _
    $region35: #{tpu_custom_call.1} parent=1 // pred_check_branch
      %34 = sbr.rel (0) target = $region37
    $region36: #{tpu_custom_call.1} parent=1 // pred_region
      _
    $region37: #{tpu_custom_call.1} parent=1 // pred_fallthru
      _
    %v36 = vld [vmem:[%s0] sm:$0x7]
    %v37 = vlaneseq
    %v38 = vshrl.u32 %v37, 7
    %v39 = vadd.s32 %v38, 8
    %v40 = vadd.s32 %v38, 16
    %v41 = vadd.s32 %v38, 24
    %v42 = vlaneseq
    %v43 = vshrl.u32 %v42, 7
    %v44 = vsub.s32 0, %v43
    %v45 = vrot.slane %v36, %v44
    %vm46 = vcmp.eq.s32.totalorder %v38, %v45
    %vm47 = vcmp.eq.s32.totalorder %v39, %v45
    %vm48 = vcmp.eq.s32.totalorder %v40, %v45
    %vm49 = vcmp.eq.s32.totalorder %v41, %v45
    %v50 = vadd.s32 %v36, 10
    %v51 = vlaneseq
    %v52 = vshrl.u32 %v51, 7
    %v53 = vsub.s32 1, %v52
    %v54 = vrot.slane %v50, %v53
    %vm55 = vcmp.eq.s32.totalorder %v38, %v54
    %vm56 = vcmp.eq.s32.totalorder %v39, %v54
    %vm57 = vcmp.eq.s32.totalorder %v40, %v54
    %vm58 = vcmp.eq.s32.totalorder %v41, %v54
    %vm59 = vmor %vm46, %vm55
    %vm60 = vmor %vm47, %vm56
    %vm61 = vmor %vm48, %vm57
    %vm62 = vmor %vm49, %vm58
    %v63 = vadd.s32 %v36, 22
    %v64 = vlaneseq
    %v65 = vshrl.u32 %v64, 7
    %v66 = vsub.s32 2, %v65
    %v67 = vrot.slane %v63, %v66
    %vm68 = vcmp.eq.s32.totalorder %v38, %v67
    %vm69 = vcmp.eq.s32.totalorder %v39, %v67
    %vm70 = vcmp.eq.s32.totalorder %v40, %v67
    %vm71 = vcmp.eq.s32.totalorder %v41, %v67
    %vm72 = vmor %vm59, %vm68
    %vm73 = vmor %vm60, %vm69
    %vm74 = vmor %vm61, %vm70
    %vm75 = vmor %vm62, %vm71
    %v76 = vsel %vm72, 1.0, 0.0
    %v77 = vsel %vm73, 1.0, 0.0
    %v78 = vsel %vm74, 1.0, 0.0
    %v79 = vsel %vm75, 1.0, 0.0
    %v80 = vpack.c.bf16 %v77, %v76
    %v81 = vpack.c.bf16 %v79, %v78
    %v82 = vld [vmem:[%s1] sm:$0x1f]
    %v83 = vpack.c.bf16 %v82, %v82
    %v84 = vld [vmem:[%s2] sm:$0xf]
    %v85 = vld [vmem:[%s2 + $0x4] sm:$0xf]
    %v86 = vld [vmem:[%s2 + $0x8] sm:$0xf]
    %v87 = vld [vmem:[%s2 + $0xc] sm:$0xf]
    %v88 = vld [vmem:[%s3] sm:$0xf]
    %v89 = vld [vmem:[%s3 + $0x4] sm:$0xf]
    %v90 = vld [vmem:[%s3 + $0x8] sm:$0xf]
    %v91 = vld [vmem:[%s3 + $0xc] sm:$0xf]
    %v96 = vunpack.c.l.b16 %v88
    %v97 = vunpack.c.l.b16 %v89
    %v98 = vunpack.c.l.b16 %v90
    %v99 = vunpack.c.l.b16 %v91
    %v100 = vpack.c.b16 %v97, %v96
    %v101 = vpack.c.b16 %v99, %v98
    %vm102 = vcmask 39936
    %v104 = vsel %vm102, %v100, 0
    %v107 = vsel %vm102, %v101, 0
    %vm109 = vcmask 1041408
    %vm110 = vcmask 1042432
    %v111 = vsel %vm109, 4294967295, 65535
    %v112 = vsel %vm110, %v111, 0
    %v114 = vand.u32 %v83, %v112
    %116 = vmatprep.subr.bf16.mxu0 0
    %117 = vmatpush1.bf16.msra.mxu0 %v114
    %118 = vmatprep.subr.bf16.mxu0 0
    %119 = vmatpush1.bf16.msra.mxu0 0
    %120 = vmatprep.subr.bf16.mxu0 0
    %121 = vmatpush1.bf16.msra.mxu0 0
    %122 = vmatprep.subr.bf16.mxu0 0
    %123 = vmatpush1.bf16.msra.mxu0 0
    %124 = vmatprep.subr.bf16.mxu0 0
    %125 = vmatpush1.bf16.msra.mxu0 0
    %126 = vmatprep.subr.bf16.mxu0 0
    %127 = vmatpush1.bf16.msra.mxu0 0
    %128 = vmatprep.subr.bf16.mxu0 0
    %129 = vmatpush1.bf16.msra.mxu0 0
    %130 = vmatprep.subr.bf16.mxu0 0
    %131 = vmatpush1.bf16.msra.mxu0 0
    %132 = vmatprep.subr.bf16.mxu0 0
    %133 = vmatpush1.bf16.msra.mxu0 0
    %134 = vmatprep.subr.bf16.mxu0 0
    %135 = vmatpush1.bf16.msra.mxu0 0
    %136 = vmatprep.subr.bf16.mxu0 0
    %137 = vmatpush1.bf16.msra.mxu0 0
    %138 = vmatprep.subr.bf16.mxu0 0
    %139 = vmatpush1.bf16.msra.mxu0 0
    %140 = vmatprep.subr.bf16.mxu0 0
    %141 = vmatpush1.bf16.msra.mxu0 0
    %142 = vmatprep.subr.bf16.mxu0 0
    %143 = vmatpush1.bf16.msra.mxu0 0
    %144 = vmatprep.subr.bf16.mxu0 0
    %145 = vmatpush1.bf16.msra.mxu0 0
    %146 = vmatprep.subr.bf16.mxu0 0
    %147 = vmatpush1.bf16.msra.mxu0 0
    %148 = vmatprep.mubr.bf16.mxu0 0
    %149 = vmatmul.mubr.bf16.gmra.mrb[0].mxu0 %v104
    %v150 = vpop.f32.mrb[0].mxu0
    %v151 = vadd.f32 0.0, %v150
    %v152 = vpop.f32.mrb[0].mxu0
    %v153 = vpop.f32.mrb[0].mxu0
    %v154 = vadd.f32 0.0, %v153
    %v155 = vpop.f32.mrb[0].mxu0
    %156 = vmatprep.mubr.bf16.mxu0 0
    %157 = vmatmul.mubr.bf16.gmra.mrb[0].mxu0 %v107
    %v158 = vpop.f32.mrb[0].mxu0
    %v159 = vadd.f32 0.0, %v158
    %v160 = vpop.f32.mrb[0].mxu0
    %v161 = vpop.f32.mrb[0].mxu0
    %v162 = vadd.f32 0.0, %v161
    %v163 = vpop.f32.mrb[0].mxu0
    %164 = vdwg.mxu0
    %v169 = vunpack.c.l.b16 %v84
    %v170 = vunpack.c.l.b16 %v85
    %v171 = vunpack.c.l.b16 %v86
    %v172 = vunpack.c.l.b16 %v87
    %v173 = vpack.c.b16 %v170, %v169
    %v174 = vpack.c.b16 %v172, %v171
    %vm175 = vcmask 236544
    %v177 = vsel %vm175, %v173, 0
    %v180 = vsel %vm175, %v174, 0
    %vm182 = vcmask 1045504
    %vm183 = vcmask 1046528
    %v184 = vsel %vm182, 4294967295, 65535
    %v185 = vsel %vm183, %v184, 0
    %v187 = vand.u32 %v81, %v185
    %189 = vmatprep.subr.bf16.mxu0 0
    %190 = vmatpush1.bf16.msra.mxu0 %v80
    %191 = vmatprep.subr.bf16.mxu0 0
    %192 = vmatpush1.bf16.msra.mxu0 %v187
    %193 = vmatprep.subr.bf16.mxu0 0
    %194 = vmatpush1.bf16.msra.mxu0 0
    %195 = vmatprep.subr.bf16.mxu0 0
    %196 = vmatpush1.bf16.msra.mxu0 0
    %197 = vmatprep.subr.bf16.mxu0 0
    %198 = vmatpush1.bf16.msra.mxu0 0
    %199 = vmatprep.subr.bf16.mxu0 0
    %200 = vmatpush1.bf16.msra.mxu0 0
    %201 = vmatprep.subr.bf16.mxu0 0
    %202 = vmatpush1.bf16.msra.mxu0 0
    %203 = vmatprep.subr.bf16.mxu0 0
    %204 = vmatpush1.bf16.msra.mxu0 0
    %205 = vmatprep.subr.bf16.mxu0 0
    %206 = vmatpush1.bf16.msra.mxu0 0
    %207 = vmatprep.subr.bf16.mxu0 0
    %208 = vmatpush1.bf16.msra.mxu0 0
    %209 = vmatprep.subr.bf16.mxu0 0
    %210 = vmatpush1.bf16.msra.mxu0 0
    %211 = vmatprep.subr.bf16.mxu0 0
    %212 = vmatpush1.bf16.msra.mxu0 0
    %213 = vmatprep.subr.bf16.mxu0 0
    %214 = vmatpush1.bf16.msra.mxu0 0
    %215 = vmatprep.subr.bf16.mxu0 0
    %216 = vmatpush1.bf16.msra.mxu0 0
    %217 = vmatprep.subr.bf16.mxu0 0
    %218 = vmatpush1.bf16.msra.mxu0 0
    %219 = vmatprep.subr.bf16.mxu0 0
    %220 = vmatpush1.bf16.msra.mxu0 0
    %221 = vmatprep.mubr.bf16.mxu0 0
    %222 = vmatmul.mubr.bf16.gmra.mrb[0].mxu0 %v177
    %v223 = vpop.f32.mrb[0].mxu0
    %v224 = vadd.f32 %v151, %v223
    %v225 = vpop.f32.mrb[0].mxu0
    %v226 = vpop.f32.mrb[0].mxu0
    %v227 = vadd.f32 %v154, %v226
    %v228 = vpop.f32.mrb[0].mxu0
    %229 = vmatprep.mubr.bf16.mxu0 0
    %230 = vmatmul.mubr.bf16.gmra.mrb[0].mxu0 %v180
    %v231 = vpop.f32.mrb[0].mxu0
    %v232 = vadd.f32 %v159, %v231
    %v233 = vpop.f32.mrb[0].mxu0
    %v234 = vpop.f32.mrb[0].mxu0
    %v235 = vadd.f32 %v162, %v234
    %v236 = vpop.f32.mrb[0].mxu0
    %237 = vdwg.mxu0
    %v238 = vld [vmem:[%s4] sm:$0xff]
    %v239 = vld [vmem:[%s4 + $0x8] sm:$0xff]
    %v240 = vld [vmem:[%s4 + $0x10] sm:$0xff]
    %v241 = vld [vmem:[%s4 + $0x18] sm:$0xff]
    %243 = vset.pattern.permute.xlu0 0
    %244 = vperm.xlu0 %243, %v238
    %v245 = vpop.permute.xlu0 %244
    %248 = vset.pattern.permute.xlu0 0
    %249 = vperm.xlu0 %248, %v239
    %v250 = vpop.permute.xlu0 %249
    %253 = vset.pattern.permute.xlu0 0
    %254 = vperm.xlu0 %253, %v240
    %v255 = vpop.permute.xlu0 %254
    %258 = vset.pattern.permute.xlu0 0
    %259 = vperm.xlu0 %258, %v241
    %v260 = vpop.permute.xlu0 %259
    %v262 = vadd.f32 %v224, %v245
    %v263 = vadd.f32 %v227, %v250
    %v264 = vadd.f32 %v232, %v255
    %v265 = vadd.f32 %v235, %v260
    %v266 = vmax.f32 %v262, 0.0
    %v267 = vmax.f32 %v263, 0.0
    %v268 = vmax.f32 %v264, 0.0
    %v269 = vmax.f32 %v265, 0.0
    %v270 = vld [vmem:[%s5] sm:$0xf]
    %v271 = vld [vmem:[%s5 + $0x4] sm:$0xf]
    %v272 = vpack.c.bf16 %v267, %v266
    %v273 = vpack.c.bf16 %v269, %v268
    %v274 = vld [vmem:[%s6] sm:$0xff]
    %v275 = vld [vmem:[%s6 + $0x8] sm:$0xff]
    %277 = vset.pattern.permute.xlu0 0
    %278 = vperm.xlu0 %277, %v274
    %v279 = vpop.permute.xlu0 %278
    %282 = vset.pattern.permute.xlu0 0
    %283 = vperm.xlu0 %282, %v275
    %v284 = vpop.permute.xlu0 %283
    %v288 = vunpack.c.l.b16 %v270
    %v289 = vunpack.c.l.b16 %v271
    %v290 = vpack.c.b16 %v289, %v288
    %vm291 = vcmask 261120
    %v293 = vsel %vm291, %v290, 0
    %295 = vmatprep.subr.bf16.mxu0 0
    %296 = vmatpush1.bf16.msra.mxu0 %v272
    %297 = vmatprep.subr.bf16.mxu0 0
    %298 = vmatpush1.bf16.msra.mxu0 %v273
    %299 = vmatprep.subr.bf16.mxu0 0
    %300 = vmatpush1.bf16.msra.mxu0 0
    %301 = vmatprep.subr.bf16.mxu0 0
    %302 = vmatpush1.bf16.msra.mxu0 0
    %303 = vmatprep.subr.bf16.mxu0 0
    %304 = vmatpush1.bf16.msra.mxu0 0
    %305 = vmatprep.subr.bf16.mxu0 0
    %306 = vmatpush1.bf16.msra.mxu0 0
    %307 = vmatprep.subr.bf16.mxu0 0
    %308 = vmatpush1.bf16.msra.mxu0 0
    %309 = vmatprep.subr.bf16.mxu0 0
    %310 = vmatpush1.bf16.msra.mxu0 0
    %311 = vmatprep.subr.bf16.mxu0 0
    %312 = vmatpush1.bf16.msra.mxu0 0
    %313 = vmatprep.subr.bf16.mxu0 0
    %314 = vmatpush1.bf16.msra.mxu0 0
    %315 = vmatprep.subr.bf16.mxu0 0
    %316 = vmatpush1.bf16.msra.mxu0 0
    %317 = vmatprep.subr.bf16.mxu0 0
    %318 = vmatpush1.bf16.msra.mxu0 0
    %319 = vmatprep.subr.bf16.mxu0 0
    %320 = vmatpush1.bf16.msra.mxu0 0
    %321 = vmatprep.subr.bf16.mxu0 0
    %322 = vmatpush1.bf16.msra.mxu0 0
    %323 = vmatprep.subr.bf16.mxu0 0
    %324 = vmatpush1.bf16.msra.mxu0 0
    %325 = vmatprep.subr.bf16.mxu0 0
    %326 = vmatpush1.bf16.msra.mxu0 0
    %327 = vmatprep.mubr.bf16.mxu0 0
    %328 = vmatmul.mubr.bf16.gmra.mrb[0].mxu0 %v293
    %v329 = vpop.f32.mrb[0].mxu0
    %v330 = vadd.f32 %v279, %v329
    %v331 = vpop.f32.mrb[0].mxu0
    %v332 = vpop.f32.mrb[0].mxu0
    %v333 = vadd.f32 %v284, %v332
    %v334 = vpop.f32.mrb[0].mxu0
    %335 = vdwg.mxu0
    %v336 = vmax.f32 %v330, 0.0
    %v337 = vmax.f32 %v333, 0.0
    %v338 = vld [vmem:[%s7] sm:$0x1]
    %v339 = vpack.c.bf16 %v337, %v336
    %v340 = vld [vmem:[#allocation2] sm:$0x1]
    %342 = vset.pattern.permute.xlu0 0
    %343 = vperm.xlu0 %342, %v340
    %v344 = vpop.permute.xlu0 %343
    %v346 = vlaneseq
    %v347 = vshrl.u32 %v346, 7
    %v348 = vsub.s32 0, %v347
    %v349 = vrot.slane %v344, %v348
    %vm350 = vcmask 130048
    %v352 = vsel %vm350, %v338, 0
    %354 = vmatprep.subr.bf16.mxu0 0
    %355 = vmatpush1.bf16.msra.mxu0 %v339
    %356 = vmatprep.subr.bf16.mxu0 0
    %357 = vmatpush1.bf16.msra.mxu0 0
    %358 = vmatprep.subr.bf16.mxu0 0
    %359 = vmatpush1.bf16.msra.mxu0 0
    %360 = vmatprep.subr.bf16.mxu0 0
    %361 = vmatpush1.bf16.msra.mxu0 0
    %362 = vmatprep.subr.bf16.mxu0 0
    %363 = vmatpush1.bf16.msra.mxu0 0
    %364 = vmatprep.subr.bf16.mxu0 0
    %365 = vmatpush1.bf16.msra.mxu0 0
    %366 = vmatprep.subr.bf16.mxu0 0
    %367 = vmatpush1.bf16.msra.mxu0 0
    %368 = vmatprep.subr.bf16.mxu0 0
    %369 = vmatpush1.bf16.msra.mxu0 0
    %370 = vmatprep.subr.bf16.mxu0 0
    %371 = vmatpush1.bf16.msra.mxu0 0
    %372 = vmatprep.subr.bf16.mxu0 0
    %373 = vmatpush1.bf16.msra.mxu0 0
    %374 = vmatprep.subr.bf16.mxu0 0
    %375 = vmatpush1.bf16.msra.mxu0 0
    %376 = vmatprep.subr.bf16.mxu0 0
    %377 = vmatpush1.bf16.msra.mxu0 0
    %378 = vmatprep.subr.bf16.mxu0 0
    %379 = vmatpush1.bf16.msra.mxu0 0
    %380 = vmatprep.subr.bf16.mxu0 0
    %381 = vmatpush1.bf16.msra.mxu0 0
    %382 = vmatprep.subr.bf16.mxu0 0
    %383 = vmatpush1.bf16.msra.mxu0 0
    %384 = vmatprep.subr.bf16.mxu0 0
    %385 = vmatpush1.bf16.msra.mxu0 0
    %386 = vmatprep.mubr.bf16.mxu0 0
    %387 = vmatmul.mubr.bf16.gmra.mrb[0].mxu0 %v352
    %v388 = vpop.f32.mrb[0].mxu0
    %v389 = vadd.f32 %v349, %v388
    %v390 = vpop.f32.mrb[0].mxu0
    %v391 = vpop.f32.mrb[0].mxu0
    %v392 = vpop.f32.mrb[0].mxu0
    %393 = vdwg.mxu0
    %v394 = vxor.u32 %v389, 2147483648
    %v395 = vmul.f32 %v394, 1.442695
    %v396 = vpow.pop %v395
    %v397 = vadd.f32 %v396, 1.0
    %v398 = vrcp.pop %v397
    %v399 = vmul.f32 1.0, %v398
    %400 = vst [vmem:[#allocation3] sm:$0x1] %v399
    // Predicated region
    $region38: #{tpu_custom_call.1} parent=1 // pred_check
      _
    $region39: #{tpu_custom_call.1} parent=1 // pred_check_branch
      %402 = sbr.rel (0) target = $region41
    $region40: #{tpu_custom_call.1} parent=1 // pred_region
      %s404 = ssub.s32 16, 16
      %405 = vsyncadd [#allocation4], %s404
      %s407 = sshll.u32 [#allocation3], 4
      %s408 = int_to_ptr.vmem [resolvable:$true] %s407
      %410 = dma.vmem_to_hbm [thread:$0]  %s408, 16, %s9, [#allocation4]
    $region41: #{tpu_custom_call.1} parent=1 // pred_fallthru
      _
    // Predicated region
    $region42: #{tpu_custom_call.1} parent=1 // pred_check
      _
    $region43: #{tpu_custom_call.1} parent=1 // pred_check_branch
      %412 = sbr.rel (0) target = $region45
    $region44: #{tpu_custom_call.1} parent=1 // pred_region
      %413 = dma.done [#allocation4], 16
    $region45: #{tpu_custom_call.1} parent=1 // pred_fallthru
      _
    %414 = vsyncpa [#allocation4], 1

</llo_original>
